<compile_context>
chip_gen: v5e
topology: v5e:2x2
jax: 0.10.0
libtpu: 0.0.40
codegen_flags: <defaults>
</compile_context>

<pallas_src>
import functools

import jax
import jax.numpy as jnp
from jax import lax
from jax.experimental import pallas as pl
from jax.experimental.pallas import tpu as pltpu


def _ln_kernel(x_ref, alpha_ref, beta_ref, o_ref, *, epsilon, inv_d):
    # x block: (TB, D, TL).  D is always the full channel axis, so the
    # per-column statistics are exact even on ragged edge blocks.
    x = x_ref[...].astype(jnp.float32)
    s1 = jnp.sum(x, axis=1, keepdims=True)                  # (TB, 1, TL)
    s2 = jnp.sum(x * x, axis=1, keepdims=True)              # (TB, 1, TL)
    mean = s1 * inv_d
    var = jnp.maximum(s2 * inv_d - mean * mean, 0.0)        # one-pass variance
    inv_std = lax.rsqrt(var + epsilon)                      # EUP, row-sized only
    y = (x - mean) * inv_std                                # VPU
    y = y * alpha_ref[...] + beta_ref[...]                  # FMA, (1,D,1) bcast
    o_ref[...] = y.astype(o_ref.dtype)


def _round_up(v, m):
    return (v + m - 1) // m * m


def _pick_tiles(B, D, L, elems_budget=1 << 20):
    """Pick (TB, TL).

    TL is lane-dense (multiple of 128).  If the whole (rounded-up) L fits in
    one tile under the ~4 MiB-of-f32 element budget, pack multiple batch rows
    per block so DMAs stay multi-MiB even for small D.
    """
    l_full = _round_up(L, 128)
    lanes = (elems_budget // max(D, 1)) // 128 * 128
    tl = max(128, min(lanes, l_full))
    tb = 1
    if tl >= l_full:
        tl = l_full
        tb = max(1, min(B, elems_budget // max(D * tl, 1)))
    return tb, tl


def ln_forward(x, alpha, beta, epsilon=1e-5, tile_b=None, tile_l=None):
    """x: (B, D, L); alpha, beta: (1, D, 1). LayerNorm over axis=1."""
    B, D, L = x.shape
    itemsize = jnp.dtype(x.dtype).itemsize

    tb, tl = _pick_tiles(B, D, L)
    if tile_b is not None:
        tb = tile_b
    if tile_l is not None:
        tl = tile_l
    assert tl % 128 == 0, "L tile must be lane-dense (multiple of 128)"

    # VMEM footprint estimate: double-buffered in/out blocks + a few f32
    # intermediates + resident alpha/beta.  Keep under ~48 MiB so the same
    # tiling is safe on v7x (64 MiB physical VMEM) as well as v5e/v6e.
    io_block = tb * D * tl * itemsize
    f32_block = tb * D * tl * 4
    est_vmem = 4 * io_block + 4 * f32_block + 2 * D * 4 + (1 << 20)
    vmem_cap = 48 * 1024 * 1024
    if est_vmem > vmem_cap:
        # TODO(synk): add a D-chunked two-pass (running-sum) path for very
        # large channel counts instead of failing loudly.
        raise ValueError(
            f"LN block ({tb},{D},{tl}) needs ~{est_vmem >> 20} MiB VMEM; "
            "reduce tile sizes or chunk the channel axis.")

    alpha32 = alpha.astype(jnp.float32)
    beta32 = beta.astype(jnp.float32)

    cost = pl.CostEstimate(
        flops=8 * B * D * L,
        transcendentals=B * L,
        bytes_accessed=2 * B * D * L * itemsize + 2 * D * 4,
    )

    kernel = functools.partial(_ln_kernel, epsilon=float(epsilon), inv_d=1.0 / D)
    grid = (pl.cdiv(B, tb), pl.cdiv(L, tl))

    return pl.pallas_call(
        kernel,
        out_shape=jax.ShapeDtypeStruct((B, D, L), x.dtype),
        grid=grid,
        in_specs=[
            pl.BlockSpec((tb, D, tl), lambda b, l: (b, 0, l)),
            pl.BlockSpec((1, D, 1), lambda b, l: (0, 0, 0)),   # grid-invariant
            pl.BlockSpec((1, D, 1), lambda b, l: (0, 0, 0)),   # grid-invariant
        ],
        out_specs=pl.BlockSpec((tb, D, tl), lambda b, l: (b, 0, l)),
        compiler_params=pltpu.CompilerParams(
            dimension_semantics=("parallel", "parallel"),
            vmem_limit_bytes=int(min(max(est_vmem, 16 << 20), vmem_cap)),
        ),
        cost_estimate=cost,
    )(x, alpha32, beta32)


def ln_ref(x, alpha, beta, epsilon=1e-5):
    mean = jnp.mean(x, axis=1, keepdims=True)
    var = jnp.mean((x - mean) ** 2, axis=1, keepdims=True)
    std = jnp.sqrt(var + epsilon)
    return (x - mean) / std * alpha + beta


if __name__ == "__main__":
    key = jax.random.PRNGKey(0)

    # Shapes matching the module's (B, dim, L) convention; L=16 exercises the
    # ragged (masked-store) lane overhang with no wrapper-side pad/slice.
    B, D, L = 2, 8, 16
    x = jax.random.normal(key, (B, D, L), dtype=jnp.float32)
    alpha = jnp.ones((1, D, 1), dtype=jnp.float32)   # nn.Parameter(torch.ones)
    beta = jnp.zeros((1, D, 1), dtype=jnp.float32)   # nn.Parameter(torch.zeros)

    y = jax.block_until_ready(ln_forward(x, alpha, beta, epsilon=1e-5))
    y_ref = ln_ref(x, alpha, beta, epsilon=1e-5)
    assert y.shape == (B, D, L)
    assert jnp.allclose(y, y_ref, atol=1e-5, rtol=1e-5)

    # Multi-tile grid with ragged edges on both axes: grid = (2, 3).
    ks = jax.random.split(jax.random.PRNGKey(1), 3)
    B2, D2, L2 = 3, 24, 300
    x2 = jax.random.normal(ks[0], (B2, D2, L2), dtype=jnp.float32)
    a2 = 1.0 + 0.1 * jax.random.normal(ks[1], (1, D2, 1), jnp.float32)
    b2 = 0.1 * jax.random.normal(ks[2], (1, D2, 1), jnp.float32)
    y2 = jax.block_until_ready(
        ln_forward(x2, a2, b2, epsilon=1e-5, tile_b=2, tile_l=128))
    assert jnp.allclose(y2, ln_ref(x2, a2, b2, epsilon=1e-5),
                        atol=1e-5, rtol=1e-5)

    # Narrow-dtype I/O path (bf16 in -> bf16 out; stats still in f32).
    x3 = x2.astype(jnp.bfloat16)
    y3 = jax.block_until_ready(ln_forward(x3, a2, b2, epsilon=1e-5))
    assert y3.dtype == jnp.bfloat16
    ref3 = ln_ref(x3.astype(jnp.float32), a2, b2, epsilon=1e-5)
    assert jnp.allclose(y3.astype(jnp.float32), ref3, atol=2e-2, rtol=2e-2)

    print("KERNEL_OK")
</pallas_src>

<mosaic_0001>
module attributes {stable_mosaic.version = 11 : i64} {
  func.func @_ln_kernel(%arg0: i32, %arg1: i32, %arg2: memref<2x8x128xf32, #tpu.memory_space<vmem>>, %arg3: memref<1x8x1xf32, #tpu.memory_space<vmem>>, %arg4: memref<1x8x1xf32, #tpu.memory_space<vmem>>, %arg5: memref<2x8x128xf32, #tpu.memory_space<vmem>>) attributes {dimension_semantics = [#tpu.dimension_semantics<parallel>, #tpu.dimension_semantics<parallel>], iteration_bounds = array<i64: 1, 1>, scalar_prefetch = 0 : i64, scratch_operands = 0 : i64, tpu.core_type = #tpu.core_type<tc>, window_params = [{transform_indices = @transform_0, window_bounds = array<i64: 2, 8, 128>}, {pipeline_mode = #tpu.pipeline_mode<synchronous>, transform_indices = @transform_1, window_bounds = array<i64: 1, 8, 1>}, {pipeline_mode = #tpu.pipeline_mode<synchronous>, transform_indices = @transform_2, window_bounds = array<i64: 1, 8, 1>}, {transform_indices = @transform_3, window_bounds = array<i64: 2, 8, 128>}]} {
    %c0 = arith.constant 0 : index
    %c0_0 = arith.constant 0 : index
    %c0_1 = arith.constant 0 : index
    %0 = vector.load %arg2[%c0, %c0_0, %c0_1] : memref<2x8x128xf32, #tpu.memory_space<vmem>>, vector<2x8x128xf32>
    %cst = arith.constant dense<0.000000e+00> : vector<2x128xf32>
    %1 = vector.multi_reduction <add>, %0, %cst [1] : vector<2x8x128xf32> to vector<2x128xf32>
    %2 = vector.shape_cast %1 : vector<2x128xf32> to vector<2x1x128xf32>
    %3 = arith.mulf %0, %0 : vector<2x8x128xf32>
    %cst_2 = arith.constant dense<0.000000e+00> : vector<2x128xf32>
    %4 = vector.multi_reduction <add>, %3, %cst_2 [1] : vector<2x8x128xf32> to vector<2x128xf32>
    %5 = vector.shape_cast %4 : vector<2x128xf32> to vector<2x1x128xf32>
    %cst_3 = arith.constant 1.250000e-01 : f32
    %6 = vector.broadcast %cst_3 : f32 to vector<2x1x128xf32>
    %7 = arith.mulf %2, %6 : vector<2x1x128xf32>
    %cst_4 = arith.constant 1.250000e-01 : f32
    %8 = vector.broadcast %cst_4 : f32 to vector<2x1x128xf32>
    %9 = arith.mulf %5, %8 : vector<2x1x128xf32>
    %10 = arith.mulf %7, %7 : vector<2x1x128xf32>
    %11 = arith.subf %9, %10 : vector<2x1x128xf32>
    %cst_5 = arith.constant 0.000000e+00 : f32
    %12 = vector.broadcast %cst_5 : f32 to vector<2x1x128xf32>
    %13 = arith.maximumf %11, %12 : vector<2x1x128xf32>
    %cst_6 = arith.constant 9.99999974E-6 : f32
    %14 = vector.broadcast %cst_6 : f32 to vector<2x1x128xf32>
    %15 = arith.addf %13, %14 : vector<2x1x128xf32>
    %16 = math.rsqrt %15 : vector<2x1x128xf32>
    %17 = vector.broadcast %7 : vector<2x1x128xf32> to vector<2x8x128xf32>
    %18 = arith.subf %0, %17 : vector<2x8x128xf32>
    %19 = vector.broadcast %16 : vector<2x1x128xf32> to vector<2x8x128xf32>
    %20 = arith.mulf %18, %19 : vector<2x8x128xf32>
    %c0_7 = arith.constant 0 : index
    %c0_8 = arith.constant 0 : index
    %c0_9 = arith.constant 0 : index
    %21 = vector.load %arg3[%c0_7, %c0_8, %c0_9] : memref<1x8x1xf32, #tpu.memory_space<vmem>>, vector<1x8x1xf32>
    %22 = vector.broadcast %21 : vector<1x8x1xf32> to vector<2x8x128xf32>
    %23 = arith.mulf %20, %22 : vector<2x8x128xf32>
    %c0_10 = arith.constant 0 : index
    %c0_11 = arith.constant 0 : index
    %c0_12 = arith.constant 0 : index
    %24 = vector.load %arg4[%c0_10, %c0_11, %c0_12] : memref<1x8x1xf32, #tpu.memory_space<vmem>>, vector<1x8x1xf32>
    %25 = vector.broadcast %24 : vector<1x8x1xf32> to vector<2x8x128xf32>
    %26 = arith.addf %23, %25 : vector<2x8x128xf32>
    %c0_13 = arith.constant 0 : index
    %c0_14 = arith.constant 0 : index
    %c0_15 = arith.constant 0 : index
    %27 = vector.load %arg5[%c0_13, %c0_14, %c0_15] : memref<2x8x128xf32, #tpu.memory_space<vmem>>, vector<2x8x128xf32>
    tpu.vector_store %arg5[%c0_13, %c0_14, %c0_15], %26 {strides = array<i32>} : memref<2x8x128xf32, #tpu.memory_space<vmem>>, vector<2x8x128xf32>,
    return
  }
  func.func @transform_0(%arg0: i32, %arg1: i32) -> (i32, i32, i32) {
    %c0_i32 = arith.constant 0 : i32
    %c0_i32_0 = arith.constant 0 : i32
    return %arg0, %c0_i32, %arg1 : i32, i32, i32
  }
  func.func @transform_1(%arg0: i32, %arg1: i32) -> (i32, i32, i32) {
    %c0_i32 = arith.constant 0 : i32
    %c0_i32_0 = arith.constant 0 : i32
    %c0_i32_1 = arith.constant 0 : i32
    %c0_i32_2 = arith.constant 0 : i32
    return %c0_i32, %c0_i32_0, %c0_i32_1 : i32, i32, i32
  }
  func.func @transform_2(%arg0: i32, %arg1: i32) -> (i32, i32, i32) {
    %c0_i32 = arith.constant 0 : i32
    %c0_i32_0 = arith.constant 0 : i32
    %c0_i32_1 = arith.constant 0 : i32
    %c0_i32_2 = arith.constant 0 : i32
    return %c0_i32, %c0_i32_0, %c0_i32_1 : i32, i32, i32
  }
  func.func @transform_3(%arg0: i32, %arg1: i32) -> (i32, i32, i32) {
    %c0_i32 = arith.constant 0 : i32
    %c0_i32_0 = arith.constant 0 : i32
    return %arg0, %c0_i32, %arg1 : i32, i32, i32
  }
}

</mosaic_0001>

<llo_original>
// kernel: tpu_custom_call.1
$region0: #{tpu_custom_call.1}
  #allocation0 [shape = 'u32[]', space=smem, size = 0x4, offset = 0x4, fixed_abs, tag = 'smem constant byte address 0x4 - core index']
  #allocation1 [shape = 'u32[72,128]{1,0:T(1,128)}', space=vmem, size = 0x9000, scoped, tag = 'internal scratch']
  %s0 = inlined_call_operand.vmem [shape: f32[2,8,16], index: 0, kind: input, shape index: {}]
  %s1 = inlined_call_operand.vmem [shape: f32[1,8,1], index: 1, kind: input, shape index: {}]
  %s2 = inlined_call_operand.vmem [shape: f32[1,8,1], index: 2, kind: input, shape index: {}]
  %s3 = inlined_call_operand.hbm [shape: f32[2,8,16], index: 3, kind: output, shape index: {}]
  %s4 = sld [smem:[#allocation0]]
  $region22: #{tpu_custom_call.1} parent=0
    _
  %s6 = ssub.s32 1, %s4
  %s7 = scalar_select 0, %s6, %s4
  $region1: #{tpu_custom_call.1} parent=0
    #allocation2 [shape = 'u8[8192]{0}', space=vmem, size = 0x2000, scoped, tag = 'output window, operand 0, single buffered']
    #allocation3 [shape = 's32[1]{0}', space=sflag, size = 0x4, scoped, tag = 'scoped memory for tpu_custom_call.1']
    %8 = vsyncpa [#allocation3], 0
    // Predicated region
    $region2: #{tpu_custom_call.1} parent=1 // pred_check
      _
    $region3: #{tpu_custom_call.1} parent=1 // pred_check_branch
      %10 = sbr.rel (0) target = $region5
    $region4: #{tpu_custom_call.1} parent=1 // pred_region
      _
    $region5: #{tpu_custom_call.1} parent=1 // pred_fallthru
      _
    // Predicated region
    $region6: #{tpu_custom_call.1} parent=1 // pred_check
      _
    $region7: #{tpu_custom_call.1} parent=1 // pred_check_branch
      %12 = sbr.rel (0) target = $region9
    $region8: #{tpu_custom_call.1} parent=1 // pred_region
      _
    $region9: #{tpu_custom_call.1} parent=1 // pred_fallthru
      _
    // Predicated region
    $region10: #{tpu_custom_call.1} parent=1 // pred_check
      _
    $region11: #{tpu_custom_call.1} parent=1 // pred_check_branch
      %14 = sbr.rel (0) target = $region13
    $region12: #{tpu_custom_call.1} parent=1 // pred_region
      _
    $region13: #{tpu_custom_call.1} parent=1 // pred_fallthru
      _
    %v15 = vld [vmem:[%s0] sm:$0xff]
    %v16 = vld [vmem:[%s0 + $0x8] sm:$0xff]
    %v17 = vrot.slane %v15, 4
    %v18 = vadd.f32 %v15, %v17
    %v19 = vrot.slane %v18, 2
    %v20 = vadd.f32 %v18, %v19
    %v21 = vrot.slane %v20, 1
    %v22 = vadd.f32 %v20, %v21
    %v23 = vrot.slane %v16, 4
    %v24 = vadd.f32 %v16, %v23
    %v25 = vrot.slane %v24, 2
    %v26 = vadd.f32 %v24, %v25
    %v27 = vrot.slane %v26, 1
    %v28 = vadd.f32 %v26, %v27
    %v29 = vmul.f32 %v15, %v15
    %v30 = vmul.f32 %v16, %v16
    %v31 = vrot.slane %v29, 4
    %v32 = vadd.f32 %v29, %v31
    %v33 = vrot.slane %v32, 2
    %v34 = vadd.f32 %v32, %v33
    %v35 = vrot.slane %v34, 1
    %v36 = vadd.f32 %v34, %v35
    %v37 = vrot.slane %v30, 4
    %v38 = vadd.f32 %v30, %v37
    %v39 = vrot.slane %v38, 2
    %v40 = vadd.f32 %v38, %v39
    %v41 = vrot.slane %v40, 1
    %v42 = vadd.f32 %v40, %v41
    %v43 = vmul.f32 %v22, 0.125
    %v44 = vmul.f32 %v28, 0.125
    %v45 = vmul.f32 %v36, 0.125
    %v46 = vmul.f32 %v42, 0.125
    %v47 = vmul.f32 %v43, %v43
    %v48 = vmul.f32 %v44, %v44
    %v49 = vsub.f32 %v45, %v47
    %v50 = vsub.f32 %v46, %v48
    %v51 = vmax.f32 %v49, 0.0
    %v52 = vmax.f32 %v50, 0.0
    %v53 = vadd.f32 %v51, 1e-05
    %v54 = vadd.f32 %v52, 1e-05
    %v55 = vrsqrt.pop %v53
    %v56 = vmul.f32 %v55, %v53
    %v57 = vmul.f32 %v56, %v55
    %v58 = vmul.f32 0.5, %v57
    %v59 = vsub.f32 1.5, %v58
    %v60 = vmul.f32 %v55, %v59
    %vm61 = vweird.f32 %v53
    %vm62 = vweird.f32 %v55
    %vm63 = vmor %vm61, %vm62
    %v64 = vsel %vm63, %v55, %v60
    %v65 = vrsqrt.pop %v54
    %v66 = vmul.f32 %v65, %v54
    %v67 = vmul.f32 %v66, %v65
    %v68 = vmul.f32 0.5, %v67
    %v69 = vsub.f32 1.5, %v68
    %v70 = vmul.f32 %v65, %v69
    %vm71 = vweird.f32 %v54
    %vm72 = vweird.f32 %v65
    %vm73 = vmor %vm71, %vm72
    %v74 = vsel %vm73, %v65, %v70
    %v75 = vsub.f32 %v15, %v43
    %v76 = vsub.f32 %v16, %v44
    %v77 = vmul.f32 %v75, %v64
    %v78 = vmul.f32 %v76, %v74
    %v79 = vld [vmem:[%s1] sm:$0xff]
    %81 = vset.pattern.permute.xlu0 0
    %82 = vperm.xlu0 %81, %v79
    %v83 = vpop.permute.xlu0 %82
    %v85 = vmul.f32 %v77, %v83
    %v86 = vmul.f32 %v78, %v83
    %v87 = vld [vmem:[%s2] sm:$0xff]
    %89 = vset.pattern.permute.xlu0 0
    %90 = vperm.xlu0 %89, %v87
    %v91 = vpop.permute.xlu0 %90
    %v93 = vadd.f32 %v85, %v91
    %v94 = vadd.f32 %v86, %v91
    %95 = vst [vmem:[#allocation2] sm:$0xff] %v93
    %96 = vst [vmem:[#allocation2 + $0x8] sm:$0xff] %v94
    // Predicated region
    $region14: #{tpu_custom_call.1} parent=1 // pred_check
      _
    $region15: #{tpu_custom_call.1} parent=1 // pred_check_branch
      %98 = sbr.rel (0) target = $region17
    $region16: #{tpu_custom_call.1} parent=1 // pred_region
      %100 = vsyncadd [#allocation3], 0
      %s101 = sshll.u32 [#allocation2], 4
      %s102 = int_to_ptr.vmem [resolvable:$true] %s101
      %s103 = sshll.u32 %s3, 4
      %s104 = int_to_ptr.hbm [resolvable:$true] %s103
      %109 = dma.vmem_to_hbm [thread:$0]  %s102, 256, %s104, [#allocation3], 128, 128, 8
    $region17: #{tpu_custom_call.1} parent=1 // pred_fallthru
      _
    // Predicated region
    $region18: #{tpu_custom_call.1} parent=1 // pred_check
      _
    $region19: #{tpu_custom_call.1} parent=1 // pred_check_branch
      %111 = sbr.rel (0) target = $region21
    $region20: #{tpu_custom_call.1} parent=1 // pred_region
      %113 = dma.done [#allocation3], 256
    $region21: #{tpu_custom_call.1} parent=1 // pred_fallthru
      _
    %114 = vsyncpa [#allocation3], 1

</llo_original>
